<compile_context>
chip_gen: v5e
topology: v5e:2x2
jax: 0.10.0
libtpu: 0.0.40
codegen_flags: <defaults>
</compile_context>

<pallas_src>
import functools
import math

import jax
import jax.numpy as jnp
from jax import lax
from jax.experimental import pallas as pl
from jax.experimental.pallas import tpu as pltpu


def _sinusoidal_pos_emb_kernel(x_ref, o_ref, *, half_dim, neg_log_scale):
    """x_ref: (Bt, 1) f32 in VMEM; o_ref: (Bt, 2*half_dim) f32 in VMEM."""
    dim = 2 * half_dim

    # Lane index 0..dim-1; fold the cos half back onto 0..half_dim-1 so the
    # frequency table spans the full lane width (one lane-dense slab, no concat).
    j = lax.broadcasted_iota(jnp.int32, (1, dim), 1)            # (1, dim)
    is_sin_half = j < half_dim
    jm = jnp.where(is_sin_half, j, j - half_dim).astype(jnp.float32)

    freqs = jnp.exp(jm * neg_log_scale)                         # (1, dim), EUP exp
    # cos(theta) == sin(theta + pi/2): single transcendental per element.
    phase = jnp.where(is_sin_half, 0.0, 0.5 * math.pi)          # (1, dim)

    ang = x_ref[...] * freqs + phase                            # (Bt, dim), VPU
    o_ref[...] = jnp.sin(ang)                                   # one EUP op + one store


def sinusoidal_pos_emb(x, dim, block_b=None):
    """x: (B,) float; returns (B, dim) float32 sinusoidal embedding."""
    assert dim % 2 == 0 and dim >= 4, "dim must be an even number >= 4"
    B = x.shape[0]
    half_dim = dim // 2
    neg_log_scale = -math.log(10000.0) / (half_dim - 1)

    x2d = x.astype(jnp.float32).reshape(B, 1)                   # sublane axis = batch

    if block_b is None:
        if B <= 8:
            block_b = B                                          # single full-extent tile
        else:
            # ~2 MiB output tile: double-buffered it stays well under the scoped
            # VMEM defaults on every generation (16 MiB v5e, 32 MiB v6e/v7x).
            rows = max(8, (2 * 1024 * 1024) // (4 * dim))
            block_b = min(B, (rows // 8) * 8)
    grid = (pl.cdiv(B, block_b),)

    kernel = functools.partial(
        _sinusoidal_pos_emb_kernel, half_dim=half_dim, neg_log_scale=neg_log_scale)

    return pl.pallas_call(
        kernel,
        out_shape=jax.ShapeDtypeStruct((B, dim), jnp.float32),
        grid=grid,
        in_specs=[pl.BlockSpec((block_b, 1), lambda i: (i, 0))],
        out_specs=pl.BlockSpec((block_b, dim), lambda i: (i, 0)),
        compiler_params=pltpu.CompilerParams(
            dimension_semantics=("parallel",)),                  # shards batch across TCs on v7x
    )(x2d)


def sinusoidal_pos_emb_ref(x, dim):
    """Plain-JAX reference mirroring the PyTorch forward."""
    half_dim = dim // 2
    emb = math.log(10000.0) / (half_dim - 1)
    freqs = jnp.exp(jnp.arange(half_dim, dtype=jnp.float32) * -emb)
    ang = x.astype(jnp.float32)[:, None] * freqs[None, :]
    return jnp.concatenate([jnp.sin(ang), jnp.cos(ang)], axis=-1)


if __name__ == "__main__":
    B, DIM = 8, 32   # small shapes consistent with the module (timesteps -> dim-wide emb)

    key = jax.random.PRNGKey(0)
    # Diffusion-style timesteps (kept modest so cross-implementation sin/exp
    # rounding stays well inside tolerance).
    x = jax.random.uniform(key, (B,), dtype=jnp.float32, minval=0.0, maxval=50.0)

    out = jax.block_until_ready(sinusoidal_pos_emb(x, DIM))
    ref = sinusoidal_pos_emb_ref(x, DIM)

    assert out.shape == (B, DIM), out.shape
    # sin(theta + pi/2) vs cos(theta) differs only by f32 rounding of pi/2 (~1e-7).
    assert jnp.allclose(out, ref, atol=1e-4, rtol=1e-4), float(jnp.max(jnp.abs(out - ref)))

    print("KERNEL_OK")
</pallas_src>

<mosaic_0001>
module attributes {stable_mosaic.version = 11 : i64} {
  func.func @_sinusoidal_pos_emb_kernel(%arg0: i32, %arg1: memref<8x1xf32, #tpu.memory_space<vmem>>, %arg2: memref<8x32xf32, #tpu.memory_space<vmem>>) attributes {dimension_semantics = [#tpu.dimension_semantics<parallel>], iteration_bounds = array<i64: 1>, scalar_prefetch = 0 : i64, scratch_operands = 0 : i64, tpu.core_type = #tpu.core_type<tc>, window_params = [{transform_indices = @transform_0, window_bounds = array<i64: 8, 1>}, {transform_indices = @transform_1, window_bounds = array<i64: 8, 32>}]} {
    %0 = tpu.iota {dimensions = array<i32: 1>} : vector<1x32xi32>
    %c16_i32 = arith.constant 16 : i32
    %1 = vector.broadcast %c16_i32 : i32 to vector<1x32xi32>
    %2 = arith.cmpi slt, %0, %1 : vector<1x32xi32>
    %c16_i32_0 = arith.constant 16 : i32
    %3 = vector.broadcast %c16_i32_0 : i32 to vector<1x32xi32>
    %4 = arith.subi %0, %3 : vector<1x32xi32>
    %5 = arith.select %2, %0, %4 : vector<1x32xi1>, vector<1x32xi32>
    %6 = arith.sitofp %5 : vector<1x32xi32> to vector<1x32xf32>
    %cst = arith.constant -0.614022672 : f32
    %7 = vector.broadcast %cst : f32 to vector<1x32xf32>
    %8 = arith.mulf %6, %7 : vector<1x32xf32>
    %9 = math.exp %8 : vector<1x32xf32>
    %cst_1 = arith.constant 0.000000e+00 : f32
    %cst_2 = arith.constant 1.57079637 : f32
    %10 = vector.broadcast %cst_1 : f32 to vector<1x32xf32>
    %11 = vector.broadcast %cst_2 : f32 to vector<1x32xf32>
    %12 = arith.select %2, %10, %11 : vector<1x32xi1>, vector<1x32xf32>
    %c0 = arith.constant 0 : index
    %c0_3 = arith.constant 0 : index
    %13 = vector.load %arg1[%c0, %c0_3] : memref<8x1xf32, #tpu.memory_space<vmem>>, vector<8x1xf32>
    %14 = vector.broadcast %13 : vector<8x1xf32> to vector<8x32xf32>
    %15 = vector.broadcast %9 : vector<1x32xf32> to vector<8x32xf32>
    %16 = arith.mulf %14, %15 : vector<8x32xf32>
    %17 = vector.broadcast %12 : vector<1x32xf32> to vector<8x32xf32>
    %18 = arith.addf %16, %17 : vector<8x32xf32>
    %19 = math.sin %18 : vector<8x32xf32>
    %c0_4 = arith.constant 0 : index
    %c0_5 = arith.constant 0 : index
    %20 = vector.load %arg2[%c0_4, %c0_5] : memref<8x32xf32, #tpu.memory_space<vmem>>, vector<8x32xf32>
    tpu.vector_store %arg2[%c0_4, %c0_5], %19 {strides = array<i32>} : memref<8x32xf32, #tpu.memory_space<vmem>>, vector<8x32xf32>,
    return
  }
  func.func @transform_0(%arg0: i32) -> (i32, i32) {
    %c0_i32 = arith.constant 0 : i32
    %c0_i32_0 = arith.constant 0 : i32
    return %arg0, %c0_i32 : i32, i32
  }
  func.func @transform_1(%arg0: i32) -> (i32, i32) {
    %c0_i32 = arith.constant 0 : i32
    %c0_i32_0 = arith.constant 0 : i32
    return %arg0, %c0_i32 : i32, i32
  }
}

</mosaic_0001>

<llo_original>
// kernel: tpu_custom_call.1
$region0: #{tpu_custom_call.1}
  #allocation0 [shape = 'u32[]', space=smem, size = 0x4, offset = 0x4, fixed_abs, tag = 'smem constant byte address 0x4 - core index']
  #allocation1 [shape = 'u32[72,128]{1,0:T(1,128)}', space=vmem, size = 0x9000, scoped, tag = 'internal scratch']
  %s0 = inlined_call_operand.vmem [shape: f32[8,1], index: 0, kind: input, shape index: {}]
  %s1 = inlined_call_operand.hbm [shape: f32[8,32], index: 1, kind: output, shape index: {}]
  %s2 = sld [smem:[#allocation0]]
  $region14: #{tpu_custom_call.1} parent=0
    _
  %s4 = ssub.s32 1, %s2
  %s5 = scalar_select 0, %s4, %s2
  $region1: #{tpu_custom_call.1} parent=0
    #allocation2 [shape = 'u8[4096]{0}', space=vmem, size = 0x1000, scoped, tag = 'output window, operand 0, single buffered']
    #allocation3 [shape = 's32[1]{0}', space=sflag, size = 0x4, scoped, tag = 'scoped memory for tpu_custom_call.1']
    %6 = vsyncpa [#allocation3], 0
    // Predicated region
    $region2: #{tpu_custom_call.1} parent=1 // pred_check
      _
    $region3: #{tpu_custom_call.1} parent=1 // pred_check_branch
      %8 = sbr.rel (0) target = $region5
    $region4: #{tpu_custom_call.1} parent=1 // pred_region
      _
    $region5: #{tpu_custom_call.1} parent=1 // pred_fallthru
      _
    %v9 = vlaneseq
    %v10 = vand.u32 %v9, 127
    %vm11 = vcmp.lt.s32.totalorder %v10, 16
    %v12 = vsub.s32 %v10, 16
    %v13 = vsel %vm11, %v10, %v12
    %v14 = vcvt.s32.f32 %v13
    %v15 = vmul.f32 %v14, -0.6140227
    %v16 = vmul.f32 %v15, 1.442695
    %v17 = vpow.pop %v16
    %v18 = vsel %vm11, 0.0, 1.5707964
    %v19 = vld [vmem:[%s0] sm:$0xff]
    %21 = vset.pattern.permute.xlu0 0
    %22 = vperm.xlu0 %21, %v19
    %v23 = vpop.permute.xlu0 %22
    %v25 = vmul.f32 %v23, %v17
    %v26 = vadd.f32 %v25, %v18
    %v27 = vand.u32 2147483647, %v26
    %vm28 = vcmp.le.f32.partialorder %v27, 0.7853982
    %vm29 = vcmp.lt.s32.totalorder %v26, 0
    %v30 = vand.u32 %v26, 2139095040
    %v31 = vshrl.u32 %v30, 23
    %v32 = vsub.s32 %v31, 127
    %v33 = vand.u32 2147483647, %v26
    %v34 = vand.u32 %v33, 8388607
    %v35 = vor.u32 %v34, 8388608
    %v36 = vsub.s32 0, %v35
    %v37 = vadd.s32 %v32, 1
    %vm38 = vcmp.gt.s32.totalorder %v37, 0
    %v39 = vsel %vm38, %v37, 0
    %v40 = vshrl.u32 %v39, 5
    %v41 = vand.u32 %v39, 31
    %v42 = vsub.s32 32, %v41
    %v43 = vshrl.u32 683565275, %v42
    %v44 = vshll.u32 683565275, %v41
    %v45 = vshrl.u32 2475754826, %v42
    %v46 = vor.u32 %v44, %v45
    %v47 = vshll.u32 2475754826, %v41
    %v48 = vshrl.u32 2131351028, %v42
    %v49 = vor.u32 %v47, %v48
    %v50 = vshll.u32 2131351028, %v41
    %v51 = vshrl.u32 2102212464, %v42
    %v52 = vor.u32 %v50, %v51
    %v53 = vshll.u32 2102212464, %v41
    %v54 = vshrl.u32 920167782, %v42
    %v55 = vor.u32 %v53, %v54
    %v56 = vshll.u32 920167782, %v41
    %v57 = vshrl.u32 1326507024, %v42
    %v58 = vor.u32 %v56, %v57
    %vm59 = vcmp.lt.s32.totalorder %v40, 1
    %vm60 = vcmp.lt.s32.totalorder %v40, 2
    %vm61 = vcmp.lt.s32.totalorder %v40, 3
    %vm62 = vcmp.lt.s32.totalorder %v40, 4
    %v63 = vsel %vm59, %v43, %v46
    %v64 = vsel %vm62, %v52, 2102212464
    %v65 = vsel %vm61, %v49, %v64
    %v66 = vsel %vm60, %v63, %v65
    %v67 = vsel %vm59, %v46, %v49
    %v68 = vsel %vm62, %v55, 920167782
    %v69 = vsel %vm61, %v52, %v68
    %v70 = vsel %vm60, %v67, %v69
    %v71 = vsel %vm59, %v49, %v52
    %v72 = vsel %vm62, %v58, 1326507024
    %v73 = vsel %vm61, %v55, %v72
    %v74 = vsel %vm60, %v71, %v73
    %v75 = vshll.u32 %v35, 8
    %v76 = vand.u32 %v75, 65535
    %v77 = vshrl.u32 %v75, 16
    %v78 = vand.u32 %v74, 65535
    %v79 = vshrl.u32 %v74, 16
    %v80 = vmul.u32 %v76, %v78
    %v81 = vmul.u32 %v76, %v79
    %v82 = vmul.u32 %v77, %v78
    %v83 = vmul.u32 %v77, %v79
    %v84 = vshll.u32 %v81, 16
    %v85 = vshrl.u32 %v81, 16
    %v86 = vshll.u32 %v82, 16
    %v87 = vshrl.u32 %v82, 16
    %vm88 = vc.u32 %v80, %v84
    %v89 = vsel %vm88, 1, 0
    %v90 = vadd.s32 %v80, %v84
    %v91 = vadd.s32 %v83, %v89
    %vm92 = vc.u32 %v90, %v86
    %v93 = vsel %vm92, 1, 0
    %v94 = vadd.s32 %v90, %v86
    %v95 = vadd.s32 %v91, %v93
    %v96 = vadd.s32 %v95, %v85
    %v97 = vadd.s32 %v96, %v87
    %v98 = vand.u32 %v75, 65535
    %v99 = vshrl.u32 %v75, 16
    %v100 = vand.u32 %v70, 65535
    %v101 = vshrl.u32 %v70, 16
    %v102 = vmul.u32 %v98, %v100
    %v103 = vmul.u32 %v98, %v101
    %v104 = vmul.u32 %v99, %v100
    %v105 = vmul.u32 %v99, %v101
    %v106 = vshll.u32 %v103, 16
    %v107 = vshrl.u32 %v103, 16
    %v108 = vshll.u32 %v104, 16
    %v109 = vshrl.u32 %v104, 16
    %vm110 = vc.u32 %v102, %v106
    %v111 = vsel %vm110, 1, 0
    %v112 = vadd.s32 %v102, %v106
    %v113 = vadd.s32 %v105, %v111
    %vm114 = vc.u32 %v112, %v108
    %v115 = vsel %vm114, 1, 0
    %v116 = vadd.s32 %v112, %v108
    %v117 = vadd.s32 %v113, %v115
    %v118 = vadd.s32 %v117, %v107
    %v119 = vadd.s32 %v118, %v109
    %v120 = vmul.u32 %v75, %v66
    %v121 = vadd.s32 %v97, %v116
    %vm122 = vc.u32 %v97, %v116
    %v123 = vadd.s32 %v119, 1
    %v124 = vsel %vm122, %v123, %v119
    %v125 = vadd.s32 %v120, %v124
    %v126 = vadd.s32 %v125, 536870912
    %v127 = vshrl.u32 %v126, 30
    %v128 = vshll.u32 %v127, 30
    %v129 = vsub.s32 %v125, %v128
    %vm130 = vcmp.lt.s32.totalorder %v129, 0
    %v131 = vsub.s32 0, %v129
    %v132 = vsel %vm130, %v131, %v129
    %v133 = vclz %v132
    %v134 = vsub.s32 %v133, 2
    %vm135 = vcmp.gt.s32.totalorder 0, %v134
    %v136 = vsel %vm135, 0, %v134
    %v137 = vsub.s32 32, %v136
    %v138 = vshll.u32 %v129, %v136
    %v139 = vshrl.u32 %v121, %v137
    %v140 = vor.u32 %v138, %v139
    %v141 = vsub.s32 4294967266, %v136
    %v142 = vadd.s32 %v141, 127
    %v143 = vshll.u32 %v142, 23
    %v144 = vor.u32 4788187, %v143
    %v145 = vand.u32 2147483647, %v144
    %v147 = vcvt.s32.f32 %v140
    %v148 = vmul.f32 %v147, %v145
    %v149 = vxor.u32 %v148, 2147483648
    %v150 = vsel %vm29, %v149, %v148
    %v151 = vsub.s32 4, %v127
    %v152 = vsel %vm29, %v151, %v127
    %v153 = vsel %vm28, %v26, %v150
    %v154 = vsel %vm28, 0, %v152
    %v155 = vmul.f32 %v153, %v153
    %v156 = vmul.f32 %v155, -0.001358992
    %v157 = vadd.f32 %v156, 0.041655596
    %v158 = vmul.f32 %v155, %v157
    %v159 = vadd.f32 %v158, -0.4999988
    %v160 = vmul.f32 %v155, %v159
    %v161 = vadd.f32 1.0, %v160
    %v162 = vmul.f32 %v153, %v153
    %v163 = vmul.f32 %v162, -0.00019511016
    %v164 = vadd.f32 %v163, 0.008332121
    %v165 = vmul.f32 %v162, %v164
    %v166 = vadd.f32 %v165, -0.16666654
    %v167 = vmul.f32 %v162, %v166
    %v168 = vadd.f32 %v167, 1.0
    %v169 = vmul.f32 %v168, %v153
    %vm170 = vweird.f32 %v26
    %v171 = vadd.s32 %v154, 3
    %v172 = vand.u32 %v171, 3
    %vm173 = vcmp.lt.s32.totalorder %v172, 2
    %vm174 = vcmp.eq.s32.totalorder %v172, 0
    %v175 = vxor.u32 %v169, 2147483648
    %v176 = vsel %vm174, %v161, %v175
    %vm177 = vcmp.eq.s32.totalorder %v172, 2
    %v178 = vxor.u32 %v161, 2147483648
    %v179 = vsel %vm177, %v178, %v169
    %v180 = vsel %vm173, %v176, %v179
    %v181 = vsel %vm170, nan, %v180
    %vm182 = vcmask 261120
    %183 = vst.msk [vmem:[#allocation2] sm:$0xff] %vm182, %v181
    // Predicated region
    $region6: #{tpu_custom_call.1} parent=1 // pred_check
      _
    $region7: #{tpu_custom_call.1} parent=1 // pred_check_branch
      %185 = sbr.rel (0) target = $region9
    $region8: #{tpu_custom_call.1} parent=1 // pred_region
      %187 = vsyncadd [#allocation3], 0
      %s189 = sshll.u32 [#allocation2], 4
      %s190 = int_to_ptr.vmem [resolvable:$true] %s189
      %s191 = sshll.u32 %s1, 4
      %s192 = int_to_ptr.hbm [resolvable:$true] %s191
      %194 = dma.vmem_to_hbm [thread:$0]  %s190, 128, %s192, [#allocation3]
    $region9: #{tpu_custom_call.1} parent=1 // pred_fallthru
      _
    // Predicated region
    $region10: #{tpu_custom_call.1} parent=1 // pred_check
      _
    $region11: #{tpu_custom_call.1} parent=1 // pred_check_branch
      %196 = sbr.rel (0) target = $region13
    $region12: #{tpu_custom_call.1} parent=1 // pred_region
      %198 = dma.done [#allocation3], 128
    $region13: #{tpu_custom_call.1} parent=1 // pred_fallthru
      _
    %199 = vsyncpa [#allocation3], 1

</llo_original>
